<compile_context>
chip_gen: v7x
topology: tpu7x:2x2x1
jax: 0.10.0
libtpu: 0.0.40
codegen_flags: <defaults>
</compile_context>

<pallas_src>
import jax
import jax.numpy as jnp
from jax.experimental import pallas as pl
from jax.experimental.pallas import tpu as pltpu


def _round_up(v, m):
    return (v + m - 1) // m * m


def _mlp_kernel(xt_ref, w1t_ref, b1t_ref, w2t_ref, b2t_ref, ot_ref):
    # Transposed (feature-major) tiles: batch is the lane axis.
    xt = xt_ref[...].astype(jnp.float32)          # (obs, TB)
    w1t = w1t_ref[...].astype(jnp.float32)        # (hidden, obs)
    b1t = b1t_ref[...].astype(jnp.float32)        # (hidden, 1)
    obs = xt.shape[0]
    n_act = ot_ref.shape[0]

    # Hidden layer: K = obs is tiny (4), so skip the MXU and do an unrolled
    # VPU broadcast multiply-accumulate producing (hidden, TB); the bias is
    # folded into the first term and ReLU is fused.
    ht = w1t[:, 0:1] * xt[0:1, :] + b1t           # (hidden, TB)
    for k in range(1, obs):                       # static, tiny unroll
        ht = ht + w1t[:, k:k + 1] * xt[k:k + 1, :]
    ht = jnp.maximum(ht, 0.0)

    # Output layer on the MXU: (NAp, hidden) @ (hidden, TB).  w2t/b2t rows
    # beyond n_actions are zero padding (sublane alignment only); they are
    # dropped at the store, so the HBM writeback is just n_actions rows and
    # the store stays lane-dense along the batch.
    ot = jnp.dot(w2t_ref[...].astype(jnp.float32), ht,
                 preferred_element_type=jnp.float32)
    ot = ot + b2t_ref[...].astype(jnp.float32)
    ot_ref[...] = ot[:n_act, :].astype(ot_ref.dtype)


def net_forward(x, w1, b1, w2, b2, *, tb=2048):
    """x: (B, obs).  w1: (obs, hidden), b1: (1, hidden),
    w2: (hidden, n_actions), b2: (1, n_actions).  Returns (B, n_actions) =
    relu(x @ w1 + b1) @ w2 + b2 (same semantics as the PyTorch Net)."""
    B, obs = x.shape
    hidden = w1.shape[1]
    n_actions = w2.shape[1]
    dtype = x.dtype

    b1 = b1.reshape(1, hidden)
    b2 = b2.reshape(1, n_actions)

    # Feature-major weights.  Pad the tiny output layer up to 8 sublanes so
    # the MXU dot operands stay (8,128)-aligned; padded rows are zero and are
    # sliced away inside the kernel before the store.
    w1t = w1.T                                     # (hidden, obs)
    b1t = b1.T                                     # (hidden, 1)
    nap = _round_up(n_actions, 8)
    w2t = jnp.pad(w2.T, ((0, nap - n_actions), (0, 0)))   # (nap, hidden)
    b2t = jnp.pad(b2.T, ((0, nap - n_actions), (0, 0)))   # (nap, 1)

    # Batch tiling: batch is the lane axis now, so TB must be a multiple of
    # 128.  Cap TB at ~half the lane-rounded batch so the grid has >= 2 steps
    # whenever possible (lets "parallel" shard across both v7x TensorCores).
    LANE = 128
    tb = max(LANE, _round_up(tb, LANE))
    b128 = _round_up(B, LANE)
    half = _round_up(max(b128 // 2, 1), LANE)
    TB = min(tb, max(half, LANE))
    Bp = _round_up(B, TB)

    # Transpose + pad the batch (padded columns are wasted-but-harmless).
    xt = jnp.pad(x, ((0, Bp - B), (0, 0))).T       # (obs, Bp)

    grid = (Bp // TB,)

    # VMEM budget: double-buffered xt/out tiles + resident weights + live
    # (hidden, TB) activations/temporaries, with 2x headroom, clamped to
    # [1 MiB, 16 MiB] (v5e scoped-VMEM safe; v7x physical is 64 MiB).
    tile_bytes = (2 * obs * TB * 4 + 2 * n_actions * TB * 4
                  + 3 * hidden * TB * 4
                  + (hidden * obs + hidden + nap * hidden + nap) * 4)
    vmem_limit = int(min(max(2 * tile_bytes, 1 << 20), 16 << 20))

    out_t = pl.pallas_call(
        _mlp_kernel,
        out_shape=jax.ShapeDtypeStruct((n_actions, Bp), dtype),
        grid=grid,
        in_specs=[
            pl.BlockSpec((obs, TB), lambda i: (0, i)),       # x^T: batch-tiled
            pl.BlockSpec((hidden, obs), lambda i: (0, 0)),   # w1^T: resident
            pl.BlockSpec((hidden, 1), lambda i: (0, 0)),     # b1^T: resident
            pl.BlockSpec((nap, hidden), lambda i: (0, 0)),   # w2^T (row-padded)
            pl.BlockSpec((nap, 1), lambda i: (0, 0)),        # b2^T (row-padded)
        ],
        out_specs=pl.BlockSpec((n_actions, TB), lambda i: (0, i)),
        compiler_params=pltpu.CompilerParams(
            dimension_semantics=("parallel",),   # megacore-shard batch on v7x
            vmem_limit_bytes=vmem_limit,
        ),
    )(xt, w1t, b1t, w2t, b2t)

    # Layout plumbing back to the PyTorch orientation.
    return out_t[:, :B].T


def init_params(key, obs_size, hidden_size, n_actions, dtype=jnp.float32):
    # Deterministic synthetic init (PyTorch-Linear-style uniform bounds).
    k1, k2, k3, k4 = jax.random.split(key, 4)
    bound1 = 1.0 / jnp.sqrt(obs_size)
    bound2 = 1.0 / jnp.sqrt(hidden_size)
    w1 = jax.random.uniform(k1, (obs_size, hidden_size), dtype, -bound1, bound1)
    b1 = jax.random.uniform(k2, (1, hidden_size), dtype, -bound1, bound1)
    w2 = jax.random.uniform(k3, (hidden_size, n_actions), dtype, -bound2, bound2)
    b2 = jax.random.uniform(k4, (1, n_actions), dtype, -bound2, bound2)
    return w1, b1, w2, b2


def _reference(x, w1, b1, w2, b2):
    return jnp.maximum(x @ w1 + b1, 0.0) @ w2 + b2


if __name__ == "__main__":
    # CartPole-v0 sizes from the chapter: obs_size=4, hidden=128, n_actions=2.
    obs_size, hidden_size, n_actions = 4, 128, 2

    key = jax.random.PRNGKey(0)
    kx1, kx2, kp = jax.random.split(key, 3)
    w1, b1, w2, b2 = init_params(kp, obs_size, hidden_size, n_actions)

    # Small single-tile batch (grid = (1,)).
    x_small = jax.random.normal(kx1, (16, obs_size), dtype=jnp.float32)
    logits_small = net_forward(x_small, w1, b1, w2, b2)
    jax.block_until_ready(logits_small)
    ref_small = _reference(x_small, w1, b1, w2, b2)
    assert logits_small.shape == (16, n_actions)
    assert jnp.allclose(logits_small, ref_small, atol=1e-5, rtol=1e-5)

    # Larger, non-tile-multiple batch to exercise the batch grid (>=2 steps)
    # and the lane-padding/unpadding path.
    x_big = jax.random.normal(kx2, (600, obs_size), dtype=jnp.float32)
    logits_big = net_forward(x_big, w1, b1, w2, b2)
    jax.block_until_ready(logits_big)
    ref_big = _reference(x_big, w1, b1, w2, b2)
    assert logits_big.shape == (600, n_actions)
    assert jnp.allclose(logits_big, ref_big, atol=1e-5, rtol=1e-5)

    print("KERNEL_OK")
</pallas_src>

<mosaic_0001>
module attributes {stable_mosaic.version = 11 : i64} {
  func.func @_mlp_kernel(%arg0: i32, %arg1: memref<4x128xf32, #tpu.memory_space<vmem>>, %arg2: memref<128x4xf32, #tpu.memory_space<vmem>>, %arg3: memref<128x1xf32, #tpu.memory_space<vmem>>, %arg4: memref<8x128xf32, #tpu.memory_space<vmem>>, %arg5: memref<8x1xf32, #tpu.memory_space<vmem>>, %arg6: memref<2x128xf32, #tpu.memory_space<vmem>>) attributes {dimension_semantics = [#tpu.dimension_semantics<parallel>], iteration_bounds = array<i64: 1>, scalar_prefetch = 0 : i64, scratch_operands = 0 : i64, tpu.core_type = #tpu.core_type<tc>, window_params = [{transform_indices = @transform_0, window_bounds = array<i64: 4, 128>}, {pipeline_mode = #tpu.pipeline_mode<synchronous>, transform_indices = @transform_1, window_bounds = array<i64: 128, 4>}, {pipeline_mode = #tpu.pipeline_mode<synchronous>, transform_indices = @transform_2, window_bounds = array<i64: 128, 1>}, {pipeline_mode = #tpu.pipeline_mode<synchronous>, transform_indices = @transform_3, window_bounds = array<i64: 8, 128>}, {pipeline_mode = #tpu.pipeline_mode<synchronous>, transform_indices = @transform_4, window_bounds = array<i64: 8, 1>}, {transform_indices = @transform_5, window_bounds = array<i64: 2, 128>}]} {
    %c0 = arith.constant 0 : index
    %c0_0 = arith.constant 0 : index
    %0 = vector.load %arg1[%c0, %c0_0] : memref<4x128xf32, #tpu.memory_space<vmem>>, vector<4x128xf32>
    %c0_1 = arith.constant 0 : index
    %c0_2 = arith.constant 0 : index
    %1 = vector.load %arg2[%c0_1, %c0_2] : memref<128x4xf32, #tpu.memory_space<vmem>>, vector<128x4xf32>
    %c0_3 = arith.constant 0 : index
    %c0_4 = arith.constant 0 : index
    %2 = vector.load %arg3[%c0_3, %c0_4] : memref<128x1xf32, #tpu.memory_space<vmem>>, vector<128x1xf32>
    %3 = vector.extract_strided_slice %1 {offsets = [0, 0], sizes = [128, 1], strides = [1, 1]} : vector<128x4xf32> to vector<128x1xf32>
    %4 = vector.extract_strided_slice %0 {offsets = [0, 0], sizes = [1, 128], strides = [1, 1]} : vector<4x128xf32> to vector<1x128xf32>
    %5 = vector.broadcast %3 : vector<128x1xf32> to vector<128x128xf32>
    %6 = vector.broadcast %4 : vector<1x128xf32> to vector<128x128xf32>
    %7 = arith.mulf %5, %6 : vector<128x128xf32>
    %8 = vector.broadcast %2 : vector<128x1xf32> to vector<128x128xf32>
    %9 = arith.addf %7, %8 : vector<128x128xf32>
    %10 = vector.extract_strided_slice %1 {offsets = [0, 1], sizes = [128, 1], strides = [1, 1]} : vector<128x4xf32> to vector<128x1xf32>
    %11 = vector.extract_strided_slice %0 {offsets = [1, 0], sizes = [1, 128], strides = [1, 1]} : vector<4x128xf32> to vector<1x128xf32>
    %12 = vector.broadcast %10 : vector<128x1xf32> to vector<128x128xf32>
    %13 = vector.broadcast %11 : vector<1x128xf32> to vector<128x128xf32>
    %14 = arith.mulf %12, %13 : vector<128x128xf32>
    %15 = arith.addf %9, %14 : vector<128x128xf32>
    %16 = vector.extract_strided_slice %1 {offsets = [0, 2], sizes = [128, 1], strides = [1, 1]} : vector<128x4xf32> to vector<128x1xf32>
    %17 = vector.extract_strided_slice %0 {offsets = [2, 0], sizes = [1, 128], strides = [1, 1]} : vector<4x128xf32> to vector<1x128xf32>
    %18 = vector.broadcast %16 : vector<128x1xf32> to vector<128x128xf32>
    %19 = vector.broadcast %17 : vector<1x128xf32> to vector<128x128xf32>
    %20 = arith.mulf %18, %19 : vector<128x128xf32>
    %21 = arith.addf %15, %20 : vector<128x128xf32>
    %22 = vector.extract_strided_slice %1 {offsets = [0, 3], sizes = [128, 1], strides = [1, 1]} : vector<128x4xf32> to vector<128x1xf32>
    %23 = vector.extract_strided_slice %0 {offsets = [3, 0], sizes = [1, 128], strides = [1, 1]} : vector<4x128xf32> to vector<1x128xf32>
    %24 = vector.broadcast %22 : vector<128x1xf32> to vector<128x128xf32>
    %25 = vector.broadcast %23 : vector<1x128xf32> to vector<128x128xf32>
    %26 = arith.mulf %24, %25 : vector<128x128xf32>
    %27 = arith.addf %21, %26 : vector<128x128xf32>
    %cst = arith.constant 0.000000e+00 : f32
    %28 = vector.broadcast %cst : f32 to vector<128x128xf32>
    %29 = arith.maximumf %27, %28 : vector<128x128xf32>
    %c0_5 = arith.constant 0 : index
    %c0_6 = arith.constant 0 : index
    %30 = vector.load %arg4[%c0_5, %c0_6] : memref<8x128xf32, #tpu.memory_space<vmem>>, vector<8x128xf32>
    %cst_7 = arith.constant dense<0.000000e+00> : vector<8x128xf32>
    %31 = tpu.matmul %30, %29, %cst_7 {dimension_numbers = #tpu.dot_dimension_numbers<[1], [0], [0], [1], [0, 0, 1, 1], [], []>} : vector<8x128xf32>, vector<128x128xf32>, vector<8x128xf32> -> vector<8x128xf32>
    %c0_8 = arith.constant 0 : index
    %c0_9 = arith.constant 0 : index
    %32 = vector.load %arg5[%c0_8, %c0_9] : memref<8x1xf32, #tpu.memory_space<vmem>>, vector<8x1xf32>
    %33 = vector.broadcast %32 : vector<8x1xf32> to vector<8x128xf32>
    %34 = arith.addf %31, %33 : vector<8x128xf32>
    %35 = vector.extract_strided_slice %34 {offsets = [0, 0], sizes = [2, 128], strides = [1, 1]} : vector<8x128xf32> to vector<2x128xf32>
    %c0_10 = arith.constant 0 : index
    %c0_11 = arith.constant 0 : index
    %36 = vector.load %arg6[%c0_10, %c0_11] : memref<2x128xf32, #tpu.memory_space<vmem>>, vector<2x128xf32>
    tpu.vector_store %arg6[%c0_10, %c0_11], %35 {strides = array<i32>} : memref<2x128xf32, #tpu.memory_space<vmem>>, vector<2x128xf32>,
    return
  }
  func.func @transform_0(%arg0: i32) -> (i32, i32) {
    %c0_i32 = arith.constant 0 : i32
    %c0_i32_0 = arith.constant 0 : i32
    return %c0_i32, %arg0 : i32, i32
  }
  func.func @transform_1(%arg0: i32) -> (i32, i32) {
    %c0_i32 = arith.constant 0 : i32
    %c0_i32_0 = arith.constant 0 : i32
    %c0_i32_1 = arith.constant 0 : i32
    return %c0_i32, %c0_i32_0 : i32, i32
  }
  func.func @transform_2(%arg0: i32) -> (i32, i32) {
    %c0_i32 = arith.constant 0 : i32
    %c0_i32_0 = arith.constant 0 : i32
    %c0_i32_1 = arith.constant 0 : i32
    return %c0_i32, %c0_i32_0 : i32, i32
  }
  func.func @transform_3(%arg0: i32) -> (i32, i32) {
    %c0_i32 = arith.constant 0 : i32
    %c0_i32_0 = arith.constant 0 : i32
    %c0_i32_1 = arith.constant 0 : i32
    return %c0_i32, %c0_i32_0 : i32, i32
  }
  func.func @transform_4(%arg0: i32) -> (i32, i32) {
    %c0_i32 = arith.constant 0 : i32
    %c0_i32_0 = arith.constant 0 : i32
    %c0_i32_1 = arith.constant 0 : i32
    return %c0_i32, %c0_i32_0 : i32, i32
  }
  func.func @transform_5(%arg0: i32) -> (i32, i32) {
    %c0_i32 = arith.constant 0 : i32
    %c0_i32_0 = arith.constant 0 : i32
    return %c0_i32, %arg0 : i32, i32
  }
}

</mosaic_0001>

<llo_original>
// kernel: tpu_custom_call.1
$region0: #{tpu_custom_call.1}
  #allocation0 [shape = 'u32[]', space=smem, size = 0x4, offset = 0x4, fixed_abs, tag = 'smem constant byte address 0x4 - core index']
  #allocation1 [shape = 'u32[144,128]{1,0:T(1,128)}', space=vmem, size = 0x12000, scoped, tag = 'internal scratch']
  %s0 = inlined_call_operand.vmem [shape: f32[4,128], index: 0, kind: input, shape index: {}]
  %s1 = inlined_call_operand.vmem [shape: f32[128,4], index: 1, kind: input, shape index: {}]
  %s2 = inlined_call_operand.vmem [shape: f32[128,1], index: 2, kind: input, shape index: {}]
  %s3 = inlined_call_operand.vmem [shape: f32[8,128], index: 3, kind: input, shape index: {}]
  %s4 = inlined_call_operand.vmem [shape: f32[8,1], index: 4, kind: input, shape index: {}]
  %s5 = inlined_call_operand.hbm [shape: f32[2,128], index: 5, kind: output, shape index: {}]
  %s6 = sld [smem:[#allocation0]]
  $region30: #{tpu_custom_call.1} parent=0
    _
  %s8 = ssub.s32 1, %s6
  %s9 = scalar_select 0, %s8, %s6
  $region1: #{tpu_custom_call.1} parent=0
    #allocation2 [shape = 'u8[1024]{0}', space=vmem, size = 0x400, scoped, tag = 'output window, operand 0, single buffered']
    #allocation3 [shape = 's32[1]{0}', space=sflag, size = 0x4, scoped, tag = 'scoped memory for tpu_custom_call.1']
    %10 = vsyncpa [#allocation3], 0
    // Predicated region
    $region2: #{tpu_custom_call.1} parent=1 // pred_check
      _
    $region3: #{tpu_custom_call.1} parent=1 // pred_check_branch
      %12 = sbr.rel (0) target = $region5
    $region4: #{tpu_custom_call.1} parent=1 // pred_region
      _
    $region5: #{tpu_custom_call.1} parent=1 // pred_fallthru
      _
    // Predicated region
    $region6: #{tpu_custom_call.1} parent=1 // pred_check
      _
    $region7: #{tpu_custom_call.1} parent=1 // pred_check_branch
      %14 = sbr.rel (0) target = $region9
    $region8: #{tpu_custom_call.1} parent=1 // pred_region
      _
    $region9: #{tpu_custom_call.1} parent=1 // pred_fallthru
      _
    // Predicated region
    $region10: #{tpu_custom_call.1} parent=1 // pred_check
      _
    $region11: #{tpu_custom_call.1} parent=1 // pred_check_branch
      %16 = sbr.rel (0) target = $region13
    $region12: #{tpu_custom_call.1} parent=1 // pred_region
      _
    $region13: #{tpu_custom_call.1} parent=1 // pred_fallthru
      _
    // Predicated region
    $region14: #{tpu_custom_call.1} parent=1 // pred_check
      _
    $region15: #{tpu_custom_call.1} parent=1 // pred_check_branch
      %18 = sbr.rel (0) target = $region17
    $region16: #{tpu_custom_call.1} parent=1 // pred_region
      _
    $region17: #{tpu_custom_call.1} parent=1 // pred_fallthru
      _
    // Predicated region
    $region18: #{tpu_custom_call.1} parent=1 // pred_check
      _
    $region19: #{tpu_custom_call.1} parent=1 // pred_check_branch
      %20 = sbr.rel (0) target = $region21
    $region20: #{tpu_custom_call.1} parent=1 // pred_region
      _
    $region21: #{tpu_custom_call.1} parent=1 // pred_fallthru
      _
    %v21 = vld [vmem:[%s0] sm:$0xf]
    %v22 = vld [vmem:[%s1] sm:$0xff]
    %v23 = vld [vmem:[%s1 + $0x8] sm:$0xff]
    %v24 = vld [vmem:[%s1 + $0x10] sm:$0xff]
    %v25 = vld [vmem:[%s1 + $0x18] sm:$0xff]
    %v26 = vld [vmem:[%s1 + $0x20] sm:$0xff]
    %v27 = vld [vmem:[%s1 + $0x28] sm:$0xff]
    %v28 = vld [vmem:[%s1 + $0x30] sm:$0xff]
    %v29 = vld [vmem:[%s1 + $0x38] sm:$0xff]
    %v30 = vld [vmem:[%s1 + $0x40] sm:$0xff]
    %v31 = vld [vmem:[%s1 + $0x48] sm:$0xff]
    %v32 = vld [vmem:[%s1 + $0x50] sm:$0xff]
    %v33 = vld [vmem:[%s1 + $0x58] sm:$0xff]
    %v34 = vld [vmem:[%s1 + $0x60] sm:$0xff]
    %v35 = vld [vmem:[%s1 + $0x68] sm:$0xff]
    %v36 = vld [vmem:[%s1 + $0x70] sm:$0xff]
    %v37 = vld [vmem:[%s1 + $0x78] sm:$0xff]
    %v38 = vld [vmem:[%s2] sm:$0xff]
    %v39 = vld [vmem:[%s2 + $0x8] sm:$0xff]
    %v40 = vld [vmem:[%s2 + $0x10] sm:$0xff]
    %v41 = vld [vmem:[%s2 + $0x18] sm:$0xff]
    %v42 = vld [vmem:[%s2 + $0x20] sm:$0xff]
    %v43 = vld [vmem:[%s2 + $0x28] sm:$0xff]
    %v44 = vld [vmem:[%s2 + $0x30] sm:$0xff]
    %v45 = vld [vmem:[%s2 + $0x38] sm:$0xff]
    %v46 = vld [vmem:[%s2 + $0x40] sm:$0xff]
    %v47 = vld [vmem:[%s2 + $0x48] sm:$0xff]
    %v48 = vld [vmem:[%s2 + $0x50] sm:$0xff]
    %v49 = vld [vmem:[%s2 + $0x58] sm:$0xff]
    %v50 = vld [vmem:[%s2 + $0x60] sm:$0xff]
    %v51 = vld [vmem:[%s2 + $0x68] sm:$0xff]
    %v52 = vld [vmem:[%s2 + $0x70] sm:$0xff]
    %v53 = vld [vmem:[%s2 + $0x78] sm:$0xff]
    %55 = vset.pattern.permute.xlu0 0
    %56 = vperm.xlu0 %55, %v22
    %v57 = vpop.permute.xlu0 %56
    %60 = vset.pattern.permute.xlu0 0
    %61 = vperm.xlu0 %60, %v23
    %v62 = vpop.permute.xlu0 %61
    %65 = vset.pattern.permute.xlu0 0
    %66 = vperm.xlu0 %65, %v24
    %v67 = vpop.permute.xlu0 %66
    %70 = vset.pattern.permute.xlu0 0
    %71 = vperm.xlu0 %70, %v25
    %v72 = vpop.permute.xlu0 %71
    %75 = vset.pattern.permute.xlu0 0
    %76 = vperm.xlu0 %75, %v26
    %v77 = vpop.permute.xlu0 %76
    %80 = vset.pattern.permute.xlu0 0
    %81 = vperm.xlu0 %80, %v27
    %v82 = vpop.permute.xlu0 %81
    %85 = vset.pattern.permute.xlu0 0
    %86 = vperm.xlu0 %85, %v28
    %v87 = vpop.permute.xlu0 %86
    %90 = vset.pattern.permute.xlu0 0
    %91 = vperm.xlu0 %90, %v29
    %v92 = vpop.permute.xlu0 %91
    %95 = vset.pattern.permute.xlu0 0
    %96 = vperm.xlu0 %95, %v30
    %v97 = vpop.permute.xlu0 %96
    %100 = vset.pattern.permute.xlu0 0
    %101 = vperm.xlu0 %100, %v31
    %v102 = vpop.permute.xlu0 %101
    %105 = vset.pattern.permute.xlu0 0
    %106 = vperm.xlu0 %105, %v32
    %v107 = vpop.permute.xlu0 %106
    %110 = vset.pattern.permute.xlu0 0
    %111 = vperm.xlu0 %110, %v33
    %v112 = vpop.permute.xlu0 %111
    %115 = vset.pattern.permute.xlu0 0
    %116 = vperm.xlu0 %115, %v34
    %v117 = vpop.permute.xlu0 %116
    %120 = vset.pattern.permute.xlu0 0
    %121 = vperm.xlu0 %120, %v35
    %v122 = vpop.permute.xlu0 %121
    %125 = vset.pattern.permute.xlu0 0
    %126 = vperm.xlu0 %125, %v36
    %v127 = vpop.permute.xlu0 %126
    %130 = vset.pattern.permute.xlu0 0
    %131 = vperm.xlu0 %130, %v37
    %v132 = vpop.permute.xlu0 %131
    %v134 = vlaneseq
    %v135 = vshrl.u32 %v134, 7
    %v136 = vsub.s32 0, %v135
    %v137 = vrot.slane %v21, %v136
    %v138 = vmul.f32 %v57, %v137
    %v139 = vmul.f32 %v62, %v137
    %v140 = vmul.f32 %v67, %v137
    %v141 = vmul.f32 %v72, %v137
    %v142 = vmul.f32 %v77, %v137
    %v143 = vmul.f32 %v82, %v137
    %v144 = vmul.f32 %v87, %v137
    %v145 = vmul.f32 %v92, %v137
    %v146 = vmul.f32 %v97, %v137
    %v147 = vmul.f32 %v102, %v137
    %v148 = vmul.f32 %v107, %v137
    %v149 = vmul.f32 %v112, %v137
    %v150 = vmul.f32 %v117, %v137
    %v151 = vmul.f32 %v122, %v137
    %v152 = vmul.f32 %v127, %v137
    %v153 = vmul.f32 %v132, %v137
    %155 = vset.pattern.permute.xlu0 0
    %156 = vperm.xlu0 %155, %v38
    %v157 = vpop.permute.xlu0 %156
    %160 = vset.pattern.permute.xlu0 0
    %161 = vperm.xlu0 %160, %v39
    %v162 = vpop.permute.xlu0 %161
    %165 = vset.pattern.permute.xlu0 0
    %166 = vperm.xlu0 %165, %v40
    %v167 = vpop.permute.xlu0 %166
    %170 = vset.pattern.permute.xlu0 0
    %171 = vperm.xlu0 %170, %v41
    %v172 = vpop.permute.xlu0 %171
    %175 = vset.pattern.permute.xlu0 0
    %176 = vperm.xlu0 %175, %v42
    %v177 = vpop.permute.xlu0 %176
    %180 = vset.pattern.permute.xlu0 0
    %181 = vperm.xlu0 %180, %v43
    %v182 = vpop.permute.xlu0 %181
    %185 = vset.pattern.permute.xlu0 0
    %186 = vperm.xlu0 %185, %v44
    %v187 = vpop.permute.xlu0 %186
    %190 = vset.pattern.permute.xlu0 0
    %191 = vperm.xlu0 %190, %v45
    %v192 = vpop.permute.xlu0 %191
    %195 = vset.pattern.permute.xlu0 0
    %196 = vperm.xlu0 %195, %v46
    %v197 = vpop.permute.xlu0 %196
    %200 = vset.pattern.permute.xlu0 0
    %201 = vperm.xlu0 %200, %v47
    %v202 = vpop.permute.xlu0 %201
    %205 = vset.pattern.permute.xlu0 0
    %206 = vperm.xlu0 %205, %v48
    %v207 = vpop.permute.xlu0 %206
    %210 = vset.pattern.permute.xlu0 0
    %211 = vperm.xlu0 %210, %v49
    %v212 = vpop.permute.xlu0 %211
    %215 = vset.pattern.permute.xlu0 0
    %216 = vperm.xlu0 %215, %v50
    %v217 = vpop.permute.xlu0 %216
    %220 = vset.pattern.permute.xlu0 0
    %221 = vperm.xlu0 %220, %v51
    %v222 = vpop.permute.xlu0 %221
    %225 = vset.pattern.permute.xlu0 0
    %226 = vperm.xlu0 %225, %v52
    %v227 = vpop.permute.xlu0 %226
    %230 = vset.pattern.permute.xlu0 0
    %231 = vperm.xlu0 %230, %v53
    %v232 = vpop.permute.xlu0 %231
    %v234 = vadd.f32 %v138, %v157
    %v235 = vadd.f32 %v139, %v162
    %v236 = vadd.f32 %v140, %v167
    %v237 = vadd.f32 %v141, %v172
    %v238 = vadd.f32 %v142, %v177
    %v239 = vadd.f32 %v143, %v182
    %v240 = vadd.f32 %v144, %v187
    %v241 = vadd.f32 %v145, %v192
    %v242 = vadd.f32 %v146, %v197
    %v243 = vadd.f32 %v147, %v202
    %v244 = vadd.f32 %v148, %v207
    %v245 = vadd.f32 %v149, %v212
    %v246 = vadd.f32 %v150, %v217
    %v247 = vadd.f32 %v151, %v222
    %v248 = vadd.f32 %v152, %v227
    %v249 = vadd.f32 %v153, %v232
    %250 = vset.pattern.permute.xlu0 1
    %251 = vperm.xlu0 %250, %v22
    %v252 = vpop.permute.xlu0 %251
    %254 = vset.pattern.permute.xlu0 1
    %255 = vperm.xlu0 %254, %v23
    %v256 = vpop.permute.xlu0 %255
    %258 = vset.pattern.permute.xlu0 1
    %259 = vperm.xlu0 %258, %v24
    %v260 = vpop.permute.xlu0 %259
    %262 = vset.pattern.permute.xlu0 1
    %263 = vperm.xlu0 %262, %v25
    %v264 = vpop.permute.xlu0 %263
    %266 = vset.pattern.permute.xlu0 1
    %267 = vperm.xlu0 %266, %v26
    %v268 = vpop.permute.xlu0 %267
    %270 = vset.pattern.permute.xlu0 1
    %271 = vperm.xlu0 %270, %v27
    %v272 = vpop.permute.xlu0 %271
    %274 = vset.pattern.permute.xlu0 1
    %275 = vperm.xlu0 %274, %v28
    %v276 = vpop.permute.xlu0 %275
    %278 = vset.pattern.permute.xlu0 1
    %279 = vperm.xlu0 %278, %v29
    %v280 = vpop.permute.xlu0 %279
    %282 = vset.pattern.permute.xlu0 1
    %283 = vperm.xlu0 %282, %v30
    %v284 = vpop.permute.xlu0 %283
    %286 = vset.pattern.permute.xlu0 1
    %287 = vperm.xlu0 %286, %v31
    %v288 = vpop.permute.xlu0 %287
    %290 = vset.pattern.permute.xlu0 1
    %291 = vperm.xlu0 %290, %v32
    %v292 = vpop.permute.xlu0 %291
    %294 = vset.pattern.permute.xlu0 1
    %295 = vperm.xlu0 %294, %v33
    %v296 = vpop.permute.xlu0 %295
    %298 = vset.pattern.permute.xlu0 1
    %299 = vperm.xlu0 %298, %v34
    %v300 = vpop.permute.xlu0 %299
    %302 = vset.pattern.permute.xlu0 1
    %303 = vperm.xlu0 %302, %v35
    %v304 = vpop.permute.xlu0 %303
    %306 = vset.pattern.permute.xlu0 1
    %307 = vperm.xlu0 %306, %v36
    %v308 = vpop.permute.xlu0 %307
    %310 = vset.pattern.permute.xlu0 1
    %311 = vperm.xlu0 %310, %v37
    %v312 = vpop.permute.xlu0 %311
    %v314 = vlaneseq
    %v315 = vshrl.u32 %v314, 7
    %v316 = vsub.s32 1, %v315
    %v317 = vrot.slane %v21, %v316
    %v318 = vmul.f32 %v252, %v317
    %v319 = vmul.f32 %v256, %v317
    %v320 = vmul.f32 %v260, %v317
    %v321 = vmul.f32 %v264, %v317
    %v322 = vmul.f32 %v268, %v317
    %v323 = vmul.f32 %v272, %v317
    %v324 = vmul.f32 %v276, %v317
    %v325 = vmul.f32 %v280, %v317
    %v326 = vmul.f32 %v284, %v317
    %v327 = vmul.f32 %v288, %v317
    %v328 = vmul.f32 %v292, %v317
    %v329 = vmul.f32 %v296, %v317
    %v330 = vmul.f32 %v300, %v317
    %v331 = vmul.f32 %v304, %v317
    %v332 = vmul.f32 %v308, %v317
    %v333 = vmul.f32 %v312, %v317
    %v334 = vadd.f32 %v234, %v318
    %v335 = vadd.f32 %v235, %v319
    %v336 = vadd.f32 %v236, %v320
    %v337 = vadd.f32 %v237, %v321
    %v338 = vadd.f32 %v238, %v322
    %v339 = vadd.f32 %v239, %v323
    %v340 = vadd.f32 %v240, %v324
    %v341 = vadd.f32 %v241, %v325
    %v342 = vadd.f32 %v242, %v326
    %v343 = vadd.f32 %v243, %v327
    %v344 = vadd.f32 %v244, %v328
    %v345 = vadd.f32 %v245, %v329
    %v346 = vadd.f32 %v246, %v330
    %v347 = vadd.f32 %v247, %v331
    %v348 = vadd.f32 %v248, %v332
    %v349 = vadd.f32 %v249, %v333
    %350 = vset.pattern.permute.xlu0 2
    %351 = vperm.xlu0 %350, %v22
    %v352 = vpop.permute.xlu0 %351
    %354 = vset.pattern.permute.xlu0 2
    %355 = vperm.xlu0 %354, %v23
    %v356 = vpop.permute.xlu0 %355
    %358 = vset.pattern.permute.xlu0 2
    %359 = vperm.xlu0 %358, %v24
    %v360 = vpop.permute.xlu0 %359
    %362 = vset.pattern.permute.xlu0 2
    %363 = vperm.xlu0 %362, %v25
    %v364 = vpop.permute.xlu0 %363
    %366 = vset.pattern.permute.xlu0 2
    %367 = vperm.xlu0 %366, %v26
    %v368 = vpop.permute.xlu0 %367
    %370 = vset.pattern.permute.xlu0 2
    %371 = vperm.xlu0 %370, %v27
    %v372 = vpop.permute.xlu0 %371
    %374 = vset.pattern.permute.xlu0 2
    %375 = vperm.xlu0 %374, %v28
    %v376 = vpop.permute.xlu0 %375
    %378 = vset.pattern.permute.xlu0 2
    %379 = vperm.xlu0 %378, %v29
    %v380 = vpop.permute.xlu0 %379
    %382 = vset.pattern.permute.xlu0 2
    %383 = vperm.xlu0 %382, %v30
    %v384 = vpop.permute.xlu0 %383
    %386 = vset.pattern.permute.xlu0 2
    %387 = vperm.xlu0 %386, %v31
    %v388 = vpop.permute.xlu0 %387
    %390 = vset.pattern.permute.xlu0 2
    %391 = vperm.xlu0 %390, %v32
    %v392 = vpop.permute.xlu0 %391
    %394 = vset.pattern.permute.xlu0 2
    %395 = vperm.xlu0 %394, %v33
    %v396 = vpop.permute.xlu0 %395
    %398 = vset.pattern.permute.xlu0 2
    %399 = vperm.xlu0 %398, %v34
    %v400 = vpop.permute.xlu0 %399
    %402 = vset.pattern.permute.xlu0 2
    %403 = vperm.xlu0 %402, %v35
    %v404 = vpop.permute.xlu0 %403
    %406 = vset.pattern.permute.xlu0 2
    %407 = vperm.xlu0 %406, %v36
    %v408 = vpop.permute.xlu0 %407
    %410 = vset.pattern.permute.xlu0 2
    %411 = vperm.xlu0 %410, %v37
    %v412 = vpop.permute.xlu0 %411
    %v414 = vlaneseq
    %v415 = vshrl.u32 %v414, 7
    %v416 = vsub.s32 2, %v415
    %v417 = vrot.slane %v21, %v416
    %v418 = vmul.f32 %v352, %v417
    %v419 = vmul.f32 %v356, %v417
    %v420 = vmul.f32 %v360, %v417
    %v421 = vmul.f32 %v364, %v417
    %v422 = vmul.f32 %v368, %v417
    %v423 = vmul.f32 %v372, %v417
    %v424 = vmul.f32 %v376, %v417
    %v425 = vmul.f32 %v380, %v417
    %v426 = vmul.f32 %v384, %v417
    %v427 = vmul.f32 %v388, %v417
    %v428 = vmul.f32 %v392, %v417
    %v429 = vmul.f32 %v396, %v417
    %v430 = vmul.f32 %v400, %v417
    %v431 = vmul.f32 %v404, %v417
    %v432 = vmul.f32 %v408, %v417
    %v433 = vmul.f32 %v412, %v417
    %v434 = vadd.f32 %v334, %v418
    %v435 = vadd.f32 %v335, %v419
    %v436 = vadd.f32 %v336, %v420
    %v437 = vadd.f32 %v337, %v421
    %v438 = vadd.f32 %v338, %v422
    %v439 = vadd.f32 %v339, %v423
    %v440 = vadd.f32 %v340, %v424
    %v441 = vadd.f32 %v341, %v425
    %v442 = vadd.f32 %v342, %v426
    %v443 = vadd.f32 %v343, %v427
    %v444 = vadd.f32 %v344, %v428
    %v445 = vadd.f32 %v345, %v429
    %v446 = vadd.f32 %v346, %v430
    %v447 = vadd.f32 %v347, %v431
    %v448 = vadd.f32 %v348, %v432
    %v449 = vadd.f32 %v349, %v433
    %450 = vset.pattern.permute.xlu0 3
    %451 = vperm.xlu0 %450, %v22
    %v452 = vpop.permute.xlu0 %451
    %454 = vset.pattern.permute.xlu0 3
    %455 = vperm.xlu0 %454, %v23
    %v456 = vpop.permute.xlu0 %455
    %458 = vset.pattern.permute.xlu0 3
    %459 = vperm.xlu0 %458, %v24
    %v460 = vpop.permute.xlu0 %459
    %462 = vset.pattern.permute.xlu0 3
    %463 = vperm.xlu0 %462, %v25
    %v464 = vpop.permute.xlu0 %463
    %466 = vset.pattern.permute.xlu0 3
    %467 = vperm.xlu0 %466, %v26
    %v468 = vpop.permute.xlu0 %467
    %470 = vset.pattern.permute.xlu0 3
    %471 = vperm.xlu0 %470, %v27
    %v472 = vpop.permute.xlu0 %471
    %474 = vset.pattern.permute.xlu0 3
    %475 = vperm.xlu0 %474, %v28
    %v476 = vpop.permute.xlu0 %475
    %478 = vset.pattern.permute.xlu0 3
    %479 = vperm.xlu0 %478, %v29
    %v480 = vpop.permute.xlu0 %479
    %482 = vset.pattern.permute.xlu0 3
    %483 = vperm.xlu0 %482, %v30
    %v484 = vpop.permute.xlu0 %483
    %486 = vset.pattern.permute.xlu0 3
    %487 = vperm.xlu0 %486, %v31
    %v488 = vpop.permute.xlu0 %487
    %490 = vset.pattern.permute.xlu0 3
    %491 = vperm.xlu0 %490, %v32
    %v492 = vpop.permute.xlu0 %491
    %494 = vset.pattern.permute.xlu0 3
    %495 = vperm.xlu0 %494, %v33
    %v496 = vpop.permute.xlu0 %495
    %498 = vset.pattern.permute.xlu0 3
    %499 = vperm.xlu0 %498, %v34
    %v500 = vpop.permute.xlu0 %499
    %502 = vset.pattern.permute.xlu0 3
    %503 = vperm.xlu0 %502, %v35
    %v504 = vpop.permute.xlu0 %503
    %506 = vset.pattern.permute.xlu0 3
    %507 = vperm.xlu0 %506, %v36
    %v508 = vpop.permute.xlu0 %507
    %510 = vset.pattern.permute.xlu0 3
    %511 = vperm.xlu0 %510, %v37
    %v512 = vpop.permute.xlu0 %511
    %v514 = vlaneseq
    %v515 = vshrl.u32 %v514, 7
    %v516 = vsub.s32 3, %v515
    %v517 = vrot.slane %v21, %v516
    %v518 = vmul.f32 %v452, %v517
    %v519 = vmul.f32 %v456, %v517
    %v520 = vmul.f32 %v460, %v517
    %v521 = vmul.f32 %v464, %v517
    %v522 = vmul.f32 %v468, %v517
    %v523 = vmul.f32 %v472, %v517
    %v524 = vmul.f32 %v476, %v517
    %v525 = vmul.f32 %v480, %v517
    %v526 = vmul.f32 %v484, %v517
    %v527 = vmul.f32 %v488, %v517
    %v528 = vmul.f32 %v492, %v517
    %v529 = vmul.f32 %v496, %v517
    %v530 = vmul.f32 %v500, %v517
    %v531 = vmul.f32 %v504, %v517
    %v532 = vmul.f32 %v508, %v517
    %v533 = vmul.f32 %v512, %v517
    %v534 = vadd.f32 %v434, %v518
    %v535 = vadd.f32 %v435, %v519
    %v536 = vadd.f32 %v436, %v520
    %v537 = vadd.f32 %v437, %v521
    %v538 = vadd.f32 %v438, %v522
    %v539 = vadd.f32 %v439, %v523
    %v540 = vadd.f32 %v440, %v524
    %v541 = vadd.f32 %v441, %v525
    %v542 = vadd.f32 %v442, %v526
    %v543 = vadd.f32 %v443, %v527
    %v544 = vadd.f32 %v444, %v528
    %v545 = vadd.f32 %v445, %v529
    %v546 = vadd.f32 %v446, %v530
    %v547 = vadd.f32 %v447, %v531
    %v548 = vadd.f32 %v448, %v532
    %v549 = vadd.f32 %v449, %v533
    %v550 = vmax.f32 %v534, 0.0
    %v551 = vmax.f32 %v535, 0.0
    %v552 = vmax.f32 %v536, 0.0
    %v553 = vmax.f32 %v537, 0.0
    %v554 = vmax.f32 %v538, 0.0
    %v555 = vmax.f32 %v539, 0.0
    %v556 = vmax.f32 %v540, 0.0
    %v557 = vmax.f32 %v541, 0.0
    %v558 = vmax.f32 %v542, 0.0
    %v559 = vmax.f32 %v543, 0.0
    %v560 = vmax.f32 %v544, 0.0
    %v561 = vmax.f32 %v545, 0.0
    %v562 = vmax.f32 %v546, 0.0
    %v563 = vmax.f32 %v547, 0.0
    %v564 = vmax.f32 %v548, 0.0
    %v565 = vmax.f32 %v549, 0.0
    %v566 = vld [vmem:[%s3] sm:$0xff]
    %v567 = vld [vmem:[%s4] sm:$0xff]
    %569 = vset.pattern.permute.xlu0 0
    %570 = vperm.xlu0 %569, %v567
    %v571 = vpop.permute.xlu0 %570
    %573 = vmatprep.subr.mxu0 0.0
    %574 = vmatpush1.msra.mxu0 %v550
    %575 = vmatprep.subr.mxu0 0.0
    %576 = vmatpush1.msra.mxu0 %v551
    %577 = vmatprep.subr.mxu0 0.0
    %578 = vmatpush1.msra.mxu0 %v552
    %579 = vmatprep.subr.mxu0 0.0
    %580 = vmatpush1.msra.mxu0 %v553
    %581 = vmatprep.subr.mxu0 0.0
    %582 = vmatpush1.msra.mxu0 %v554
    %583 = vmatprep.subr.mxu0 0.0
    %584 = vmatpush1.msra.mxu0 %v555
    %585 = vmatprep.subr.mxu0 0.0
    %586 = vmatpush1.msra.mxu0 %v556
    %587 = vmatprep.subr.mxu0 0.0
    %588 = vmatpush1.msra.mxu0 %v557
    %589 = vmatprep.subr.mxu0 0.0
    %590 = vmatpush1.msra.mxu0 %v558
    %591 = vmatprep.subr.mxu0 0.0
    %592 = vmatpush1.msra.mxu0 %v559
    %593 = vmatprep.subr.mxu0 0.0
    %594 = vmatpush1.msra.mxu0 %v560
    %595 = vmatprep.subr.mxu0 0.0
    %596 = vmatpush1.msra.mxu0 %v561
    %597 = vmatprep.subr.mxu0 0.0
    %598 = vmatpush1.msra.mxu0 %v562
    %599 = vmatprep.subr.mxu0 0.0
    %600 = vmatpush1.msra.mxu0 %v563
    %601 = vmatprep.subr.mxu0 0.0
    %602 = vmatpush1.msra.mxu0 %v564
    %603 = vmatprep.subr.mxu0 0.0
    %604 = vmatpush1.msra.mxu0 %v565
    %605 = vmatprep.subr.mxu0 0.0
    %606 = vmatpush1.msra.mxu0 0.0
    %607 = vmatprep.subr.mxu0 0.0
    %608 = vmatpush1.msra.mxu0 0.0
    %609 = vmatprep.subr.mxu0 0.0
    %610 = vmatpush1.msra.mxu0 0.0
    %611 = vmatprep.subr.mxu0 0.0
    %612 = vmatpush1.msra.mxu0 0.0
    %613 = vmatprep.subr.mxu0 0.0
    %614 = vmatpush1.msra.mxu0 0.0
    %615 = vmatprep.subr.mxu0 0.0
    %616 = vmatpush1.msra.mxu0 0.0
    %617 = vmatprep.subr.mxu0 0.0
    %618 = vmatpush1.msra.mxu0 0.0
    %619 = vmatprep.subr.mxu0 0.0
    %620 = vmatpush1.msra.mxu0 0.0
    %621 = vmatprep.subr.mxu0 0.0
    %622 = vmatpush1.msra.mxu0 0.0
    %623 = vmatprep.subr.mxu0 0.0
    %624 = vmatpush1.msra.mxu0 0.0
    %625 = vmatprep.subr.mxu0 0.0
    %626 = vmatpush1.msra.mxu0 0.0
    %627 = vmatprep.subr.mxu0 0.0
    %628 = vmatpush1.msra.mxu0 0.0
    %629 = vmatprep.subr.mxu0 0.0
    %630 = vmatpush1.msra.mxu0 0.0
    %631 = vmatprep.subr.mxu0 0.0
    %632 = vmatpush1.msra.mxu0 0.0
    %633 = vmatprep.subr.mxu0 0.0
    %634 = vmatpush1.msra.mxu0 0.0
    %635 = vmatprep.subr.mxu0 0.0
    %636 = vmatpush1.msra.mxu0 0.0
    %637 = vmatprep.mubr.f32.mxu0 0.0
    %638 = vmatmul.mubr.f32.gmra.mrb[0].mxu0 %v566
    %v639 = vpop.f32.mrb[0].mxu0
    %v640 = vadd.f32 %v571, %v639
    %v641 = vpop.f32.mrb[0].mxu0
    %642 = vdwg.mxu0
    %643 = vst [vmem:[#allocation2] sm:$0x3] %v640
    // Predicated region
    $region22: #{tpu_custom_call.1} parent=1 // pred_check
      _
    $region23: #{tpu_custom_call.1} parent=1 // pred_check_branch
      %645 = sbr.rel (0) target = $region25
    $region24: #{tpu_custom_call.1} parent=1 // pred_region
      %s647 = ssub.s32 32, 32
      %648 = vsyncadd [#allocation3], %s647
      %s650 = sshll.u32 [#allocation2], 4
      %s651 = int_to_ptr.vmem [resolvable:$true] %s650
      %653 = dma.vmem_to_hbm [thread:$0]  %s651, 32, %s5, [#allocation3]
    $region25: #{tpu_custom_call.1} parent=1 // pred_fallthru
      _
    // Predicated region
    $region26: #{tpu_custom_call.1} parent=1 // pred_check
      _
    $region27: #{tpu_custom_call.1} parent=1 // pred_check_branch
      %655 = sbr.rel (0) target = $region29
    $region28: #{tpu_custom_call.1} parent=1 // pred_region
      %656 = dma.done [#allocation3], 32
    $region29: #{tpu_custom_call.1} parent=1 // pred_fallthru
      _
    %657 = vsyncpa [#allocation3], 1

</llo_original>
